<compile_context>
chip_gen: v7x
topology: tpu7x:2x2x1
jax: 0.10.0
libtpu: 0.0.40
codegen_flags: <defaults>
</compile_context>

<pallas_src>
import random

import jax
import jax.numpy as jnp
from jax.experimental import pallas as pl
from jax.experimental.pallas import tpu as pltpu


def _round_up(x, m):
    return ((x + m - 1) // m) * m


def _scoped_vmem_limit_bytes():
    """Per-generation scoped VMEM limit with headroom.

    ~48 MiB on v7x (64 MiB physical per TensorCore), 96 MiB on v5e/v6e
    (128 MiB physical). Falls back to the smallest (v7x) assumption.
    """
    phys = 64 << 20
    try:
        info = pltpu.get_tpu_info()
        cap = getattr(info, "vmem_capacity_bytes", None)
        if cap:
            phys = int(cap)
    except Exception:
        pass
    return int(min(phys * 3 // 4, 96 << 20))


def _make_conv1x1_kernel(b_tile, c, use_vpu):
    """Build the per-block kernel.

    Block layout: x/o = (b_tile, C, tile_s) with the big spatial axis in lanes.
    """
    if use_vpu:
        # Small C: C unrolled broadcast-FMAs on the VPU. Weight comes in as
        # (C_in, C_out, 1) so each per-input-channel column broadcasts along
        # lanes with no sublane shuffling and no MXU push/pop.
        def kernel(x_ref, w_ref, b_ref, o_ref):
            x = x_ref[...].astype(jnp.float32)          # (B, C_in, S)
            w = w_ref[...].astype(jnp.float32)          # (C_in, C_out, 1)
            b = b_ref[...].astype(jnp.float32)          # (C_out, 1)
            y = b[None, :, :] + w[0][None, :, :] * x[:, 0:1, :]
            for ci in range(1, c):
                y = y + w[ci][None, :, :] * x[:, ci:ci + 1, :]
            o_ref[...] = y.astype(o_ref.dtype)
    else:
        # Larger C: MXU matmul per image in the block, f32 accumulation.
        def kernel(x_ref, w_ref, b_ref, o_ref):
            w = w_ref[...]                               # (C_out, C_in)
            b = b_ref[...]                               # (C_out, 1)
            for bi in range(b_tile):
                y = jnp.dot(w, x_ref[bi], preferred_element_type=jnp.float32) + b
                o_ref[bi] = y.astype(o_ref.dtype)
    return kernel


def conv1x1_nchw(x_nchw, weight, bias, *, target_block_bytes=4 << 20):
    """1x1 conv (C -> C) on an NCHW tensor via a tiled, lane-dense Pallas kernel."""
    N, C, H, W = x_nchw.shape
    HW = H * W
    dtype_bytes = jnp.dtype(x_nchw.dtype).itemsize

    # Lane-dense layout: (N, C, H*W) with the spatial axis padded to a multiple
    # of 128 so every store is full-width (no masked vst.msk).
    S = max(128, _round_up(HW, 128))
    x3 = x_nchw.reshape(N, C, HW)
    if S != HW:
        x3 = jnp.pad(x3, ((0, 0), (0, 0), (0, S - HW)))
    b2 = bias.reshape(C, 1)

    # --- block sizing from a per-block byte budget (mem-bound kernel). ---
    lane_bytes = C * dtype_bytes
    max_lanes = max(128, (target_block_bytes // lane_bytes) // 128 * 128)
    tile_s = min(S, max_lanes)                       # always a multiple of 128

    use_vpu = C <= (8 if dtype_bytes >= 4 else 16)
    b_cap = N if use_vpu else min(N, 8)              # bound unroll on MXU path
    b_tile = max(1, min(b_cap, target_block_bytes // (C * tile_s * dtype_bytes)))
    while N % b_tile != 0:                           # keep batch blocks exact
        b_tile -= 1

    n_b = N // b_tile
    n_s = pl.cdiv(S, tile_s)

    # v7x has 2 TensorCores: ensure the ("parallel","parallel") grid has at
    # least 2 steps so both cores get work (harmless on v5e/v6e's single TC).
    if n_b * n_s < 2:
        if S >= 256:
            tile_s = max(128, _round_up(S // 2, 128))
            n_s = pl.cdiv(S, tile_s)
        elif b_tile >= 2:
            b_tile = b_tile // 2
            while N % b_tile != 0:
                b_tile -= 1
            n_b = N // b_tile

    grid = (n_b, n_s)

    if use_vpu:
        w_arg = jnp.transpose(weight).reshape(C, C, 1)   # (C_in, C_out, 1)
        w_spec = pl.BlockSpec((C, C, 1), lambda n, s: (0, 0, 0))
    else:
        w_arg = weight                                    # (C_out, C_in)
        w_spec = pl.BlockSpec((C, C), lambda n, s: (0, 0))

    kernel = _make_conv1x1_kernel(b_tile, C, use_vpu)

    out3 = pl.pallas_call(
        kernel,
        out_shape=jax.ShapeDtypeStruct((N, C, S), x_nchw.dtype),
        grid_spec=pl.GridSpec(
            grid=grid,
            in_specs=[
                pl.BlockSpec((b_tile, C, tile_s), lambda n, s: (n, 0, s)),
                w_spec,
                pl.BlockSpec((C, 1), lambda n, s: (0, 0)),
            ],
            out_specs=pl.BlockSpec((b_tile, C, tile_s), lambda n, s: (n, 0, s)),
        ),
        compiler_params=pltpu.CompilerParams(
            dimension_semantics=("parallel", "parallel"),
            vmem_limit_bytes=_scoped_vmem_limit_bytes(),
        ),
    )(x3, w_arg, b2)

    if S != HW:
        out3 = out3[:, :, :HW]
    return out3.reshape(N, C, H, W)


def random_apply_1x1conv(x_nchw, weight, bias, p, *, rng=random):
    """RandomApply(fn=1x1 conv, p).

    The coin flip happens host-side (matching `if random.random() > self.p`),
    so the identity branch returns x directly: no kernel launch, no HBM copy.
    """
    if rng.random() > p:
        return x_nchw
    return conv1x1_nchw(x_nchw, weight, bias)


if __name__ == "__main__":
    key = jax.random.PRNGKey(0)
    k_x, k_w, k_b = jax.random.split(key, 3)

    N, C, H, W = 2, 4, 16, 16
    p = 0.5

    x = jax.random.normal(k_x, (N, C, H, W), dtype=jnp.float32)
    weight = jax.random.normal(k_w, (C, C), dtype=jnp.float32) * 0.1
    bias = jax.random.normal(k_b, (C,), dtype=jnp.float32) * 0.1

    # Pure-JAX reference for the fn(x) branch.
    y_ref = jnp.einsum("oc,nchw->nohw", weight, x) + bias[None, :, None, None]

    # 1) Exercise the Pallas kernel directly (the "apply" branch).
    y = jax.block_until_ready(conv1x1_nchw(x, weight, bias))
    assert y.shape == x.shape and y.dtype == x.dtype
    assert jnp.allclose(y, y_ref, atol=1e-5, rtol=1e-5)

    # 2) Non-128-aligned spatial size (14x14) exercises the host-side pad +
    #    single-batch + forced >=2-step grid paths.
    x2 = jax.random.normal(k_x, (1, C, 14, 14), dtype=jnp.float32)
    y2_ref = jnp.einsum("oc,nchw->nohw", weight, x2) + bias[None, :, None, None]
    y2 = jax.block_until_ready(conv1x1_nchw(x2, weight, bias))
    assert y2.shape == x2.shape and y2.dtype == x2.dtype
    assert jnp.allclose(y2, y2_ref, atol=1e-5, rtol=1e-5)

    # 3) Full RandomApply semantics with a deterministic host RNG, checking
    #    whichever branch the coin flip selects on each call.
    rng_call = random.Random(0)
    rng_check = random.Random(0)
    for _ in range(6):
        out = jax.block_until_ready(
            random_apply_1x1conv(x, weight, bias, p, rng=rng_call))
        expected = x if rng_check.random() > p else y_ref
        assert out.shape == x.shape and out.dtype == x.dtype
        assert jnp.allclose(out, expected, atol=1e-5, rtol=1e-5)

    print("KERNEL_OK")
</pallas_src>

<mosaic_0001>
module attributes {stable_mosaic.version = 11 : i64} {
  func.func @kernel(%arg0: i32, %arg1: i32, %arg2: memref<2x4x128xf32, #tpu.memory_space<vmem>>, %arg3: memref<4x4x1xf32, #tpu.memory_space<vmem>>, %arg4: memref<4x1xf32, #tpu.memory_space<vmem>>, %arg5: memref<2x4x128xf32, #tpu.memory_space<vmem>>) attributes {dimension_semantics = [#tpu.dimension_semantics<parallel>, #tpu.dimension_semantics<parallel>], iteration_bounds = array<i64: 1, 2>, scalar_prefetch = 0 : i64, scratch_operands = 0 : i64, tpu.core_type = #tpu.core_type<tc>, window_params = [{transform_indices = @transform_0, window_bounds = array<i64: 2, 4, 128>}, {pipeline_mode = #tpu.pipeline_mode<synchronous>, transform_indices = @transform_1, window_bounds = array<i64: 4, 4, 1>}, {pipeline_mode = #tpu.pipeline_mode<synchronous>, transform_indices = @transform_2, window_bounds = array<i64: 4, 1>}, {transform_indices = @transform_3, window_bounds = array<i64: 2, 4, 128>}]} {
    %c0 = arith.constant 0 : index
    %c0_0 = arith.constant 0 : index
    %c0_1 = arith.constant 0 : index
    %0 = vector.load %arg2[%c0, %c0_0, %c0_1] : memref<2x4x128xf32, #tpu.memory_space<vmem>>, vector<2x4x128xf32>
    %c0_2 = arith.constant 0 : index
    %c0_3 = arith.constant 0 : index
    %c0_4 = arith.constant 0 : index
    %1 = vector.load %arg3[%c0_2, %c0_3, %c0_4] : memref<4x4x1xf32, #tpu.memory_space<vmem>>, vector<4x4x1xf32>
    %c0_5 = arith.constant 0 : index
    %c0_6 = arith.constant 0 : index
    %2 = vector.load %arg4[%c0_5, %c0_6] : memref<4x1xf32, #tpu.memory_space<vmem>>, vector<4x1xf32>
    %3 = vector.shape_cast %2 : vector<4x1xf32> to vector<1x4x1xf32>
    %4 = vector.extract_strided_slice %1 {offsets = [0, 0, 0], sizes = [1, 4, 1], strides = [1, 1, 1]} : vector<4x4x1xf32> to vector<1x4x1xf32>
    %5 = vector.shape_cast %4 : vector<1x4x1xf32> to vector<4x1xf32>
    %6 = vector.shape_cast %5 : vector<4x1xf32> to vector<1x4x1xf32>
    %7 = vector.extract_strided_slice %0 {offsets = [0, 0, 0], sizes = [2, 1, 128], strides = [1, 1, 1]} : vector<2x4x128xf32> to vector<2x1x128xf32>
    %8 = vector.broadcast %6 : vector<1x4x1xf32> to vector<2x4x128xf32>
    %9 = vector.broadcast %7 : vector<2x1x128xf32> to vector<2x4x128xf32>
    %10 = arith.mulf %8, %9 : vector<2x4x128xf32>
    %11 = vector.broadcast %3 : vector<1x4x1xf32> to vector<2x4x128xf32>
    %12 = arith.addf %11, %10 : vector<2x4x128xf32>
    %13 = vector.extract_strided_slice %1 {offsets = [1, 0, 0], sizes = [1, 4, 1], strides = [1, 1, 1]} : vector<4x4x1xf32> to vector<1x4x1xf32>
    %14 = vector.shape_cast %13 : vector<1x4x1xf32> to vector<4x1xf32>
    %15 = vector.shape_cast %14 : vector<4x1xf32> to vector<1x4x1xf32>
    %16 = vector.extract_strided_slice %0 {offsets = [0, 1, 0], sizes = [2, 1, 128], strides = [1, 1, 1]} : vector<2x4x128xf32> to vector<2x1x128xf32>
    %17 = vector.broadcast %15 : vector<1x4x1xf32> to vector<2x4x128xf32>
    %18 = vector.broadcast %16 : vector<2x1x128xf32> to vector<2x4x128xf32>
    %19 = arith.mulf %17, %18 : vector<2x4x128xf32>
    %20 = arith.addf %12, %19 : vector<2x4x128xf32>
    %21 = vector.extract_strided_slice %1 {offsets = [2, 0, 0], sizes = [1, 4, 1], strides = [1, 1, 1]} : vector<4x4x1xf32> to vector<1x4x1xf32>
    %22 = vector.shape_cast %21 : vector<1x4x1xf32> to vector<4x1xf32>
    %23 = vector.shape_cast %22 : vector<4x1xf32> to vector<1x4x1xf32>
    %24 = vector.extract_strided_slice %0 {offsets = [0, 2, 0], sizes = [2, 1, 128], strides = [1, 1, 1]} : vector<2x4x128xf32> to vector<2x1x128xf32>
    %25 = vector.broadcast %23 : vector<1x4x1xf32> to vector<2x4x128xf32>
    %26 = vector.broadcast %24 : vector<2x1x128xf32> to vector<2x4x128xf32>
    %27 = arith.mulf %25, %26 : vector<2x4x128xf32>
    %28 = arith.addf %20, %27 : vector<2x4x128xf32>
    %29 = vector.extract_strided_slice %1 {offsets = [3, 0, 0], sizes = [1, 4, 1], strides = [1, 1, 1]} : vector<4x4x1xf32> to vector<1x4x1xf32>
    %30 = vector.shape_cast %29 : vector<1x4x1xf32> to vector<4x1xf32>
    %31 = vector.shape_cast %30 : vector<4x1xf32> to vector<1x4x1xf32>
    %32 = vector.extract_strided_slice %0 {offsets = [0, 3, 0], sizes = [2, 1, 128], strides = [1, 1, 1]} : vector<2x4x128xf32> to vector<2x1x128xf32>
    %33 = vector.broadcast %31 : vector<1x4x1xf32> to vector<2x4x128xf32>
    %34 = vector.broadcast %32 : vector<2x1x128xf32> to vector<2x4x128xf32>
    %35 = arith.mulf %33, %34 : vector<2x4x128xf32>
    %36 = arith.addf %28, %35 : vector<2x4x128xf32>
    %c0_7 = arith.constant 0 : index
    %c0_8 = arith.constant 0 : index
    %c0_9 = arith.constant 0 : index
    %37 = vector.load %arg5[%c0_7, %c0_8, %c0_9] : memref<2x4x128xf32, #tpu.memory_space<vmem>>, vector<2x4x128xf32>
    tpu.vector_store %arg5[%c0_7, %c0_8, %c0_9], %36 {strides = array<i32>} : memref<2x4x128xf32, #tpu.memory_space<vmem>>, vector<2x4x128xf32>,
    return
  }
  func.func @transform_0(%arg0: i32, %arg1: i32) -> (i32, i32, i32) {
    %c0_i32 = arith.constant 0 : i32
    %c0_i32_0 = arith.constant 0 : i32
    return %arg0, %c0_i32, %arg1 : i32, i32, i32
  }
  func.func @transform_1(%arg0: i32, %arg1: i32) -> (i32, i32, i32) {
    %c0_i32 = arith.constant 0 : i32
    %c0_i32_0 = arith.constant 0 : i32
    %c0_i32_1 = arith.constant 0 : i32
    %c0_i32_2 = arith.constant 0 : i32
    return %c0_i32, %c0_i32_0, %c0_i32_1 : i32, i32, i32
  }
  func.func @transform_2(%arg0: i32, %arg1: i32) -> (i32, i32) {
    %c0_i32 = arith.constant 0 : i32
    %c0_i32_0 = arith.constant 0 : i32
    %c0_i32_1 = arith.constant 0 : i32
    return %c0_i32, %c0_i32_0 : i32, i32
  }
  func.func @transform_3(%arg0: i32, %arg1: i32) -> (i32, i32, i32) {
    %c0_i32 = arith.constant 0 : i32
    %c0_i32_0 = arith.constant 0 : i32
    return %arg0, %c0_i32, %arg1 : i32, i32, i32
  }
}

</mosaic_0001>

<llo_original>
// kernel: tpu_custom_call.1
$region0: #{tpu_custom_call.1}
  #allocation0 [shape = 'u32[]', space=smem, size = 0x4, offset = 0x4, fixed_abs, tag = 'smem constant byte address 0x4 - core index']
  #allocation1 [shape = 'u32[144,128]{1,0:T(1,128)}', space=vmem, size = 0x12000, scoped, tag = 'internal scratch']
  %s0 = inlined_call_operand.vmem [shape: f32[2,4,256], index: 0, kind: input, shape index: {}]
  %s1 = inlined_call_operand.vmem [shape: f32[4,4,1], index: 1, kind: input, shape index: {}]
  %s2 = inlined_call_operand.vmem [shape: f32[4,1], index: 2, kind: input, shape index: {}]
  %s3 = inlined_call_operand.hbm [shape: f32[2,4,256], index: 3, kind: output, shape index: {}]
  %s4 = sld [smem:[#allocation0]]
  $region86: #{tpu_custom_call.1} parent=0
    _
  %s6 = ssub.s32 1, %s4
  %s7 = scalar_select 0, %s6, %s4
  $region1: #{tpu_custom_call.1} parent=0
    #allocation2 [shape = 'u8[8192]{0}', space=vmem, size = 0x2000, scoped, tag = 'input window, operand 0']
    #allocation3 [shape = 'u8[8192]{0}', space=vmem, size = 0x2000, scoped, tag = 'output window, operand 0']
    #allocation4 [shape = 's32[2]{0}', space=sflag, size = 0x8, scoped, tag = 'scoped memory for tpu_custom_call.1']
    %8 = vsyncpa [#allocation4], 0
    %s9 = scalar_lea.sflag [#allocation4], 1
    %10 = vsyncpa %s9, 0
    loop: start=0, step=1, limit=4
    $region2: #{tpu_custom_call.1} parent=1 // loop_pre_header
      _
    $region3: #{tpu_custom_call.1} parent=1 // loop_header
      %s12 = sphi 0, %s16
      %p13 = scmp.ge.s32.totalorder %s12, 4
      %s19 = sphi 0, %s31
      %s20 = sphi 0, %s27
      %s21 = sphi 0, %s19
      %s22 = sphi 0, %s20
      %s23 = sphi 0, %s21
      %s24 = sphi 0, %s22
      %s36 = sphi 0, %s38
      %s39 = sphi 0, %s36
      %s40 = sphi 0, %s39
      %s56 = sphi 0, %s40
      %s60 = sphi 0, %s60
      %s62 = sphi 0, %s60
      %s63 = sphi 0, %s62
      %s77 = sphi 0, %s63
      %s81 = sphi 0, %s81
      %s83 = sphi 0, %s81
      %s84 = sphi 0, %s83
      %s98 = sphi 0, %s84
      %s106 = sphi 0, %s108
      %s109 = sphi 0, %s106
      %s110 = sphi 0, %s109
      %s126 = sphi 0, %s110
    $region4: #{tpu_custom_call.1} parent=1 // loop_header_branch
      %15 = sbr.rel (%p13) target = $region8
    $region5: #{tpu_custom_call.1} parent=1 // loop_body
      %s17 = ssub.s32 %s12, 1
      %s18 = ssub.s32 %s12, 2
      %s25 = sadd.s32 1, %s20
      %p26 = scmp.ge.s32.totalorder %s25, 2
      %s27 = scalar_select %p26, 0, %s25
      %s28 = sadd.s32 1, %s19
      %s29 = scalar_select %p26, %s28, %s19
      %p30 = scmp.ge.s32.totalorder %s29, 1
      %s31 = scalar_select %p30, 0, %s29
      %s32 = ssub.s32 %s19, %s31
      %s33 = ssub.s32 %s20, %s27
      %s34 = sor.u32 %s32, %s33
      %p35 = scmp.eq.s32.totalorder %s34, 0
      %s37 = sadd.s32 %s36, 1
      %s38 = scalar_select %p35, %s36, %s37
      %p41 = pneg %p35
      %p42 = scmp.eq.s32.totalorder %s12, 1
      %p43 = por %p41, %p42
      %p44 = scmp.ne.s32.totalorder %s36, %s39
      %p45 = scmp.eq.s32.totalorder %s12, 0
      %p46 = por %p44, %p45
      %p47 = scmp.ne.s32.totalorder %s36, %s39
      %p48 = scmp.eq.s32.totalorder %s17, 1
      %p49 = por %p47, %p48
      %p50 = scmp.ne.s32.totalorder %s39, %s40
      %p51 = scmp.eq.s32.totalorder %s17, 0
      %p52 = por %p50, %p51
      %p53 = scmp.ne.s32.totalorder %s39, %s40
      %p54 = scmp.eq.s32.totalorder %s18, 1
      %p55 = por %p53, %p54
      %p57 = scmp.ne.s32.totalorder %s40, %s56
      %p58 = scmp.eq.s32.totalorder %s18, 0
      %p59 = por %p57, %p58
      %s61 = sadd.s32 %s60, 1
      %p64 = scmp.eq.s32.totalorder %s12, 1
      %p65 = scmp.ne.s32.totalorder %s60, %s62
      %p66 = scmp.eq.s32.totalorder %s12, 0
      %p67 = por %p65, %p66
      %p68 = scmp.ne.s32.totalorder %s60, %s62
      %p69 = scmp.eq.s32.totalorder %s17, 1
      %p70 = por %p68, %p69
      %p71 = scmp.ne.s32.totalorder %s62, %s63
      %p72 = scmp.eq.s32.totalorder %s17, 0
      %p73 = por %p71, %p72
      %p74 = scmp.ne.s32.totalorder %s62, %s63
      %p75 = scmp.eq.s32.totalorder %s18, 1
      %p76 = por %p74, %p75
      %p78 = scmp.ne.s32.totalorder %s63, %s77
      %p79 = scmp.eq.s32.totalorder %s18, 0
      %p80 = por %p78, %p79
      %s82 = sadd.s32 %s81, 1
      %p85 = scmp.eq.s32.totalorder %s12, 1
      %p86 = scmp.ne.s32.totalorder %s81, %s83
      %p87 = scmp.eq.s32.totalorder %s12, 0
      %p88 = por %p86, %p87
      %p89 = scmp.ne.s32.totalorder %s81, %s83
      %p90 = scmp.eq.s32.totalorder %s17, 1
      %p91 = por %p89, %p90
      %p92 = scmp.ne.s32.totalorder %s83, %s84
      %p93 = scmp.eq.s32.totalorder %s17, 0
      %p94 = por %p92, %p93
      %p95 = scmp.ne.s32.totalorder %s83, %s84
      %p96 = scmp.eq.s32.totalorder %s18, 1
      %p97 = por %p95, %p96
      %p99 = scmp.ne.s32.totalorder %s84, %s98
      %p100 = scmp.eq.s32.totalorder %s18, 0
      %p101 = por %p99, %p100
      %s102 = ssub.s32 %s19, %s31
      %s103 = ssub.s32 %s20, %s27
      %s104 = sor.u32 %s102, %s103
      %p105 = scmp.eq.s32.totalorder %s104, 0
      %s107 = sadd.s32 %s106, 1
      %s108 = scalar_select %p105, %s106, %s107
      %p111 = pneg %p105
      %p112 = scmp.eq.s32.totalorder %s12, 1
      %p113 = por %p111, %p112
      %p114 = scmp.ne.s32.totalorder %s106, %s109
      %p115 = scmp.eq.s32.totalorder %s12, 0
      %p116 = por %p114, %p115
      %p117 = scmp.ne.s32.totalorder %s106, %s109
      %p118 = scmp.eq.s32.totalorder %s17, 1
      %p119 = por %p117, %p118
      %p120 = scmp.ne.s32.totalorder %s109, %s110
      %p121 = scmp.eq.s32.totalorder %s17, 0
      %p122 = por %p120, %p121
      %p123 = scmp.ne.s32.totalorder %s109, %s110
      %p124 = scmp.eq.s32.totalorder %s18, 1
      %p125 = por %p123, %p124
      %p127 = scmp.ne.s32.totalorder %s110, %s126
      %p128 = scmp.eq.s32.totalorder %s18, 0
      %p129 = por %p127, %p128
      %p130 = scmp.le.s32.totalorder 1, %s12
      %p131 = scmp.lt.s32.totalorder %s12, 3
      %p132 = pnand %p130, %p131
      %p133 = pneg %p132
      // Predicated region
      $region9: #{tpu_custom_call.1} parent=5 // pred_check
        _
      $region10: #{tpu_custom_call.1} parent=5 // pred_check_branch
        %135 = sbr.rel (%p132) target = $region12
      $region11: #{tpu_custom_call.1} parent=5 // pred_region
        %s136 = ssub.s32 %s12, 1
        // Predicated region
        $region13: #{tpu_custom_call.1} parent=11 // pred_check
          %p137 = pneg %p73
        $region14: #{tpu_custom_call.1} parent=11 // pred_check_branch
          %139 = sbr.rel (%p137) target = $region16
        $region15: #{tpu_custom_call.1} parent=11 // pred_region
          _
        $region16: #{tpu_custom_call.1} parent=11 // pred_fallthru
          _
        // Predicated region
        $region17: #{tpu_custom_call.1} parent=11 // pred_check
          %p140 = pneg %p94
        $region18: #{tpu_custom_call.1} parent=11 // pred_check_branch
          %142 = sbr.rel (%p140) target = $region20
        $region19: #{tpu_custom_call.1} parent=11 // pred_region
          _
        $region20: #{tpu_custom_call.1} parent=11 // pred_fallthru
          _
      $region12: #{tpu_custom_call.1} parent=5 // pred_fallthru
        _
      %p143 = scmp.lt.s32.totalorder %s12, 2
      // Predicated region
      $region21: #{tpu_custom_call.1} parent=5 // pred_check
        %p144 = pneg %p143
      $region22: #{tpu_custom_call.1} parent=5 // pred_check_branch
        %146 = sbr.rel (%p144) target = $region24
      $region23: #{tpu_custom_call.1} parent=5 // pred_region
        // Predicated region
        $region25: #{tpu_custom_call.1} parent=23 // pred_check
          %p147 = pneg %p46
        $region26: #{tpu_custom_call.1} parent=23 // pred_check_branch
          %149 = sbr.rel (%p147) target = $region28
        $region27: #{tpu_custom_call.1} parent=23 // pred_region
          %s150 = sand.u32 %s36, 1
          %s151 = sand.u32 %s36, 1
          %s152 = smul.addr %s151, 8
          %s153 = scalar_lea.vmem [#allocation2], %s152
          %s154 = smul.u32 2, %s19
          %s155 = smul.addr %s154, 2
          %s156 = sadd.s32 %s20, %s155
          %s157 = smul.addr %s156, 4
          %s158 = scalar_lea.vmem %s0, %s157
          // Predicated region
          $region29: #{tpu_custom_call.1} parent=27 // pred_check
            _
          $region30: #{tpu_custom_call.1} parent=27 // pred_check_branch
            %160 = sbr.rel (0) target = $region32
          $region31: #{tpu_custom_call.1} parent=27 // pred_region
            // Predicated region
            $region33: #{tpu_custom_call.1} parent=31 // pred_check
              _
            $region34: #{tpu_custom_call.1} parent=31 // pred_check_branch
              %162 = sbr.rel target = $region36
            $region35: #{tpu_custom_call.1} parent=31 // pred_region
              // Predicated region
              $region48: #{tpu_custom_call.1} parent=35 // pred_check
                _
              $region49: #{tpu_custom_call.1} parent=35 // pred_check_branch
                %179 = sbr.rel (0) target = $region51
              $region50: #{tpu_custom_call.1} parent=35 // pred_region
                loop: start=0, step=1, limit=1
                $region52: #{tpu_custom_call.1} parent=50 // loop_pre_header
                  _
                $region53: #{tpu_custom_call.1} parent=50 // loop_header
                  %s181 = sphi 0, %s185
                  %p182 = scmp.ge.s32.totalorder %s181, 1
                  %s186 = sphi %s158, %s158
                  %s187 = sphi %s153, %s153
                $region54: #{tpu_custom_call.1} parent=50 // loop_header_branch
                  %184 = sbr.rel (%p182) target = $region58
                $region55: #{tpu_custom_call.1} parent=50 // loop_body
                  _
                $region56: #{tpu_custom_call.1} parent=50 // loop_footer
                  %s185 = sadd.s32 1, %s181
                $region57: #{tpu_custom_call.1} parent=50 // loop_footer_branch
                  %180 = sbr.rel target = $region53
                $region58: #{tpu_custom_call.1} parent=50 // loop_exit
                  _
                loop: start=0, step=1, limit=1
                $region59: #{tpu_custom_call.1} parent=50 // loop_pre_header
                  _
                $region60: #{tpu_custom_call.1} parent=50 // loop_header
                  %s190 = sphi 0, %s194
                  %p191 = scmp.ge.s32.totalorder %s190, 1
                  %s195 = sphi %s158, %s158
                  %s196 = sphi %s153, %s153
                $region61: #{tpu_custom_call.1} parent=50 // loop_header_branch
                  %193 = sbr.rel (%p191) target = $region65
                $region62: #{tpu_custom_call.1} parent=50 // loop_body
                  %v197 = vld [vmem:[%s195] sm:$0xf]
                  %198 = vst [vmem:[%s196] sm:$0xf] %v197
                  %v199 = vld [vmem:[%s195 + $0x8] sm:$0xf]
                  %200 = vst [vmem:[%s196 + $0x4] sm:$0xf] %v199
                $region63: #{tpu_custom_call.1} parent=50 // loop_footer
                  %s194 = sadd.s32 1, %s190
                $region64: #{tpu_custom_call.1} parent=50 // loop_footer_branch
                  %189 = sbr.rel target = $region60
                $region65: #{tpu_custom_call.1} parent=50 // loop_exit
                  _
              $region51: #{tpu_custom_call.1} parent=35 // pred_fallthru
                _
            $region36: #{tpu_custom_call.1} parent=31 // pred_fallthru
              _
            // Predicated region
            $region37: #{tpu_custom_call.1} parent=31 // pred_check
              _
            $region38: #{tpu_custom_call.1} parent=31 // pred_check_branch
              %164 = sbr.rel (0) target = $region40
            $region39: #{tpu_custom_call.1} parent=31 // pred_region
              loop: start=0, step=1, limit=1
              $region41: #{tpu_custom_call.1} parent=39 // loop_pre_header
                _
              $region42: #{tpu_custom_call.1} parent=39 // loop_header
                %s167 = sphi 0, %s171
                %p168 = scmp.ge.s32.totalorder %s167, 1
                %s172 = sphi %s158, %s158
                %s173 = sphi %s153, %s153
              $region43: #{tpu_custom_call.1} parent=39 // loop_header_branch
                %170 = sbr.rel (%p168) target = $region47
              $region44: #{tpu_custom_call.1} parent=39 // loop_body
                %v174 = vld [vmem:[%s172] sm:$0xf]
                %175 = vst [vmem:[%s173] sm:$0xf] %v174
                %v176 = vld [vmem:[%s172 + $0x8] sm:$0xf]
                %177 = vst [vmem:[%s173 + $0x4] sm:$0xf] %v176
              $region45: #{tpu_custom_call.1} parent=39 // loop_footer
                %s171 = sadd.s32 1, %s167
              $region46: #{tpu_custom_call.1} parent=39 // loop_footer_branch
                %166 = sbr.rel target = $region42
              $region47: #{tpu_custom_call.1} parent=39 // loop_exit
                _
            $region40: #{tpu_custom_call.1} parent=31 // pred_fallthru
              _
          $region32: #{tpu_custom_call.1} parent=27 // pred_fallthru
            _
          %201 = vnop
        $region28: #{tpu_custom_call.1} parent=23 // pred_fallthru
          _
      $region24: #{tpu_custom_call.1} parent=5 // pred_fallthru
        _
      %p202 = scmp.le.s32.totalorder 1, %s12
      %p203 = scmp.lt.s32.totalorder %s12, 3
      %p204 = pnand %p202, %p203
      %p205 = pneg %p204
      // Predicated region
      $region66: #{tpu_custom_call.1} parent=5 // pred_check
        _
      $region67: #{tpu_custom_call.1} parent=5 // pred_check_branch
        %207 = sbr.rel (%p204) target = $region69
      $region68: #{tpu_custom_call.1} parent=5 // pred_region
        %s208 = ssub.s32 %s12, 1
        %s209 = sand.u32 %s39, 1
        %s210 = sand.u32 %s39, 1
        %s211 = smul.addr %s210, 8
        %s212 = scalar_lea.vmem [#allocation2], %s211
        // Predicated region
        $region70: #{tpu_custom_call.1} parent=68 // pred_check
          %p213 = pneg %p52
        $region71: #{tpu_custom_call.1} parent=68 // pred_check_branch
          %215 = sbr.rel (%p213) target = $region73
        $region72: #{tpu_custom_call.1} parent=68 // pred_region
          _
        $region73: #{tpu_custom_call.1} parent=68 // pred_fallthru
          _
        %s216 = sand.u32 %s39, 1
        %s217 = sand.u32 %s39, 1
        %s218 = smul.addr %s217, 8
        %s219 = scalar_lea.vmem [#allocation2], %s218
        %p220 = pneg %p52
        %p221 = pneg %p49
        %p222 = pneg %p73
        %p223 = pneg %p70
        %p224 = pneg %p94
        %p225 = pneg %p91
        %p226 = pneg %p122
        %p227 = pneg %p119
        %s228 = sand.u32 %s109, 1
        %s229 = scalar_lea.sflag [#allocation4], %s228
        %s230 = sand.u32 %s109, 1
        %s231 = smul.addr %s230, 8
        %s232 = scalar_lea.vmem [#allocation3], %s231
        %s233 = smul.u32 2, %s21
        %s234 = smul.u32 2, %s21
        %v235 = vld [vmem:[%s212] sm:$0xf]
        %v236 = vld [vmem:[%s212 + $0x4] sm:$0xf]
        %v237 = vld [vmem:[%s1] sm:$0xf]
        %v238 = vld [vmem:[%s1 + $0x4] sm:$0xf]
        %v239 = vld [vmem:[%s1 + $0x8] sm:$0xf]
        %v240 = vld [vmem:[%s1 + $0xc] sm:$0xf]
        %v241 = vld [vmem:[%s2] sm:$0xf]
        %243 = vset.pattern.permute.xlu0 0
        %244 = vperm.xlu0 %243, %v237
        %v245 = vpop.permute.xlu0 %244
        %v247 = vlaneseq
        %v248 = vshrl.u32 %v247, 7
        %v249 = vsub.s32 0, %v248
        %v250 = vrot.slane %v235, %v249
        %v251 = vlaneseq
        %v252 = vshrl.u32 %v251, 7
        %v253 = vsub.s32 0, %v252
        %v254 = vrot.slane %v236, %v253
        %v255 = vmul.f32 %v245, %v250
        %v256 = vmul.f32 %v245, %v254
        %258 = vset.pattern.permute.xlu0 0
        %259 = vperm.xlu0 %258, %v241
        %v260 = vpop.permute.xlu0 %259
        %v262 = vadd.f32 %v260, %v255
        %v263 = vadd.f32 %v260, %v256
        %265 = vset.pattern.permute.xlu0 0
        %266 = vperm.xlu0 %265, %v238
        %v267 = vpop.permute.xlu0 %266
        %v269 = vlaneseq
        %v270 = vshrl.u32 %v269, 7
        %v271 = vsub.s32 1, %v270
        %v272 = vrot.slane %v235, %v271
        %v273 = vlaneseq
        %v274 = vshrl.u32 %v273, 7
        %v275 = vsub.s32 1, %v274
        %v276 = vrot.slane %v236, %v275
        %v277 = vmul.f32 %v267, %v272
        %v278 = vmul.f32 %v267, %v276
        %v279 = vadd.f32 %v262, %v277
        %v280 = vadd.f32 %v263, %v278
        %282 = vset.pattern.permute.xlu0 0
        %283 = vperm.xlu0 %282, %v239
        %v284 = vpop.permute.xlu0 %283
        %v286 = vlaneseq
        %v287 = vshrl.u32 %v286, 7
        %v288 = vsub.s32 2, %v287
        %v289 = vrot.slane %v235, %v288
        %v290 = vlaneseq
        %v291 = vshrl.u32 %v290, 7
        %v292 = vsub.s32 2, %v291
        %v293 = vrot.slane %v236, %v292
        %v294 = vmul.f32 %v284, %v289
        %v295 = vmul.f32 %v284, %v293
        %v296 = vadd.f32 %v279, %v294
        %v297 = vadd.f32 %v280, %v295
        %299 = vset.pattern.permute.xlu0 0
        %300 = vperm.xlu0 %299, %v240
        %v301 = vpop.permute.xlu0 %300
        %v303 = vlaneseq
        %v304 = vshrl.u32 %v303, 7
        %v305 = vsub.s32 3, %v304
        %v306 = vrot.slane %v235, %v305
        %v307 = vlaneseq
        %v308 = vshrl.u32 %v307, 7
        %v309 = vsub.s32 3, %v308
        %v310 = vrot.slane %v236, %v309
        %v311 = vmul.f32 %v301, %v306
        %v312 = vmul.f32 %v301, %v310
        %v313 = vadd.f32 %v296, %v311
        %v314 = vadd.f32 %v297, %v312
        %315 = vst [vmem:[%s232] sm:$0xf] %v313
        %316 = vst [vmem:[%s232 + $0x4] sm:$0xf] %v314
        %s317 = sand.u32 %s109, 1
        %s318 = scalar_lea.sflag [#allocation4], %s317
        %s319 = sand.u32 %s109, 1
        %s320 = smul.addr %s319, 8
        %s321 = scalar_lea.vmem [#allocation3], %s320
        // Predicated region
        $region74: #{tpu_custom_call.1} parent=68 // pred_check
          %p322 = pneg %p119
        $region75: #{tpu_custom_call.1} parent=68 // pred_check_branch
          %324 = sbr.rel (%p322) target = $region77
        $region76: #{tpu_custom_call.1} parent=68 // pred_region
          %s325 = smul.u32 2, %s21
          %s327 = ssub.s32 128, 128
          %328 = vsyncadd %s318, %s327
          %s329 = smul.addr %s325, 2
          %s330 = sadd.s32 %s22, %s329
          %s331 = smul.addr %s330, 64
          %s332 = scalar_lea.hbm %s3, %s331
          %s333 = sshll.u32 %s321, 4
          %s334 = int_to_ptr.vmem [resolvable:$true] %s333
          %339 = dma.vmem_to_hbm [thread:$0]  %s334, 128, %s332, %s318, 64, 128, 4
        $region77: #{tpu_custom_call.1} parent=68 // pred_fallthru
          _
      $region69: #{tpu_custom_call.1} parent=5 // pred_fallthru
        _
      %p340 = scmp.le.s32.totalorder 2, %s12
      // Predicated region
      $region78: #{tpu_custom_call.1} parent=5 // pred_check
        %p341 = pneg %p340
      $region79: #{tpu_custom_call.1} parent=5 // pred_check_branch
        %343 = sbr.rel (%p341) target = $region81
      $region80: #{tpu_custom_call.1} parent=5 // pred_region
        %s344 = ssub.s32 %s12, 2
        // Predicated region
        $region82: #{tpu_custom_call.1} parent=80 // pred_check
          %p345 = pneg %p125
        $region83: #{tpu_custom_call.1} parent=80 // pred_check_branch
          %347 = sbr.rel (%p345) target = $region85
        $region84: #{tpu_custom_call.1} parent=80 // pred_region
          %s348 = sand.u32 %s110, 1
          %s349 = scalar_lea.sflag [#allocation4], %s348
          %s350 = sand.u32 %s110, 1
          %s351 = smul.addr %s350, 8
          %s352 = scalar_lea.vmem [#allocation3], %s351
          %353 = dma.done %s349, 128
        $region85: #{tpu_custom_call.1} parent=80 // pred_fallthru
          _
      $region81: #{tpu_custom_call.1} parent=5 // pred_fallthru
        _
    $region6: #{tpu_custom_call.1} parent=1 // loop_footer
      %s16 = sadd.s32 1, %s12
    $region7: #{tpu_custom_call.1} parent=1 // loop_footer_branch
      %11 = sbr.rel target = $region3
    $region8: #{tpu_custom_call.1} parent=1 // loop_exit
      _
    %354 = vsyncpa [#allocation4], 1
    %s355 = scalar_lea.sflag [#allocation4], 1
    %356 = vsyncpa %s355, 1

</llo_original>
